<compile_context>
chip_gen: v5e
topology: v5e:2x2
jax: 0.10.0
libtpu: 0.0.40
codegen_flags: <defaults>
</compile_context>

<pallas_src>
import math

import jax
import jax.numpy as jnp
from jax.experimental import pallas as pl
from jax.experimental.pallas import tpu as pltpu

_VMEM_BUDGET = 40 << 20          # conservative: fits v7x's 64 MiB/TC with slack
_TARGET_OUT_BLOCK = 8 << 20      # ~8 MiB output block per grid step


# ----------------------------------------------------------------------------
# Kernel: one MXU matmul per grid step.
#   x block  (..., R, K)  -> flattened to (R, K)   (leading unit dims only)
#   rw block (K, Cg)       0/1 replication matrix (constant index -> resident)
#   o block  (..., R, Cg)
# Integer inputs are cast to the Rw dtype (f32) inside the kernel and written
# back in the original dtype, avoiding extra wrapper-side HBM passes.
# ----------------------------------------------------------------------------
def _upsample_kernel(x_ref, rw_ref, o_ref):
    x = x_ref[...]
    x = x.reshape(-1, x.shape[-1]).astype(rw_ref.dtype)
    y = jnp.dot(x, rw_ref[...], preferred_element_type=jnp.float32)
    o_ref[...] = y.reshape(o_ref.shape).astype(o_ref.dtype)


# ----------------------------------------------------------------------------
# Helpers
# ----------------------------------------------------------------------------
def _nearest_src_index(out_size: int, in_size: int) -> jnp.ndarray:
    # PyTorch 'nearest' rule: src = floor(dst * in / out)
    dst = jnp.arange(out_size)
    return jnp.minimum((dst * in_size) // out_size, in_size - 1)


def _row_align(itemsize: int) -> int:
    # sublane packing: 8 rows for 32-bit, 16 for 16-bit, 32 for 8-bit dtypes
    return max(8, 32 // max(1, int(itemsize)))


def _round_up(x: int, m: int) -> int:
    return ((x + m - 1) // m) * m


def _choose_group(cout: int, must_divide: int) -> int:
    """Smallest G making G*cout a multiple of 128 (lane-dense output blocks),
    constrained so grouping stays a pure metadata reshape."""
    g = 128 // math.gcd(int(cout), 128)
    if g > 1 and must_divide % g != 0:
        # TODO(synk): pad rows to keep lane-dense output for awkward shapes.
        return 1
    return g


def _choose_block_rows(total_rows: int, out_row_bytes: int, row_align: int,
                       target_out_bytes: int) -> int:
    """Rows per grid step: as large as the output-byte target allows, sublane
    aligned, preferring an even (>=2) step count for v7x's two TensorCores."""
    if total_rows <= row_align:
        return int(total_rows)
    cap = _round_up(total_rows, row_align)
    r = (max(target_out_bytes, out_row_bytes) // out_row_bytes) // row_align * row_align
    r = max(row_align, min(r, cap))
    steps = pl.cdiv(total_rows, r)
    if steps == 1:
        r2 = _round_up(pl.cdiv(total_rows, 2), row_align)
        if pl.cdiv(total_rows, r2) >= 2:
            r = r2
    elif steps % 2 == 1:
        r2 = _round_up(pl.cdiv(total_rows, steps + 1), row_align)
        if r2 >= row_align and pl.cdiv(total_rows, r2) % 2 == 0:
            r = r2
    return int(r)


def _replication_matrix(w_in: int, s_h: int, s_w: int, group: int, dtype):
    """(group*W, group*s_h*W_out) block-diagonal 0/1 matrix: each input row
    segment -> its W-upsampled row duplicated s_h times along the lane axis."""
    w_out = w_in * s_w
    src_w = _nearest_src_index(w_out, w_in)
    rw = (jnp.arange(w_in)[:, None] == src_w[None, :]).astype(dtype)   # (W, W_out)
    rw = jnp.tile(rw, (1, s_h))                                        # (W, s_h*W_out)
    if group > 1:
        rw = jnp.kron(jnp.eye(group, dtype=dtype), rw)                 # block diagonal
    return rw


def _vmem_limit_bytes(in_block_bytes: int, out_block_bytes: int,
                      rw_bytes: int) -> int:
    needed = 2 * (in_block_bytes + out_block_bytes) + 2 * rw_bytes
    return int(min(48 << 20, max(needed + (4 << 20), 24 << 20)))


# ----------------------------------------------------------------------------
# 4-D (NCHW) path
# ----------------------------------------------------------------------------
def _upsample_nearest_4d(x, s_h: int, s_w: int):
    N, C, H, W = x.shape
    H_out, W_out = H * s_h, W * s_w
    orig_dtype = x.dtype
    is_float = jnp.issubdtype(orig_dtype, jnp.floating)
    # TODO(synk): integer magnitudes > 2**24 lose precision in the f32 matmul path.
    rw_dtype = orig_dtype if is_float else jnp.float32

    cout = s_h * W_out
    T = N * C * H
    G = _choose_group(cout, T)
    rw = _replication_matrix(W, s_h, s_w, G, rw_dtype)      # (G*W, G*cout)
    Tg, K, Cg = T // G, G * W, G * cout

    x_rows = x.reshape(Tg, K)                               # metadata-only view

    in_item = jnp.dtype(orig_dtype).itemsize
    rw_bytes = K * Cg * jnp.dtype(rw_dtype).itemsize
    in_row_bytes = K * in_item
    out_row_bytes = Cg * in_item
    row_align = _row_align(in_item)

    avail = max(_VMEM_BUDGET - 2 * rw_bytes, 4 << 20)
    target_out = max(1 << 20, min(
        _TARGET_OUT_BLOCK,
        avail * out_row_bytes // (2 * (out_row_bytes + in_row_bytes))))
    R = _choose_block_rows(Tg, out_row_bytes, row_align, target_out)
    steps = pl.cdiv(Tg, R)

    cost = pl.CostEstimate(
        flops=int(2 * Tg * K * Cg),
        transcendentals=0,
        bytes_accessed=int(Tg * (in_row_bytes + out_row_bytes) + rw_bytes))

    out_flat = pl.pallas_call(
        _upsample_kernel,
        out_shape=jax.ShapeDtypeStruct((Tg, Cg), orig_dtype),
        grid_spec=pltpu.PrefetchScalarGridSpec(
            num_scalar_prefetch=0,
            grid=(steps,),
            in_specs=[
                pl.BlockSpec((R, K), lambda i: (i, 0)),
                # Constant block index: DMA'd once, stays resident in VMEM.
                pl.BlockSpec((K, Cg), lambda i: (0, 0)),
            ],
            out_specs=pl.BlockSpec((R, Cg), lambda i: (i, 0)),
        ),
        compiler_params=pltpu.CompilerParams(
            dimension_semantics=("parallel",),
            vmem_limit_bytes=_vmem_limit_bytes(
                R * in_row_bytes, R * out_row_bytes, rw_bytes),
        ),
        cost_estimate=cost,
    )(x_rows, rw)

    # Pure metadata reshapes: (Tg, G*s_h*W_out) -> (N,C,H,s_h,W_out) -> NCHW out
    return out_flat.reshape(N, C, H, s_h, W_out).reshape(N, C, H_out, W_out)


# ----------------------------------------------------------------------------
# 5-D (NCDHW) path: depth replication rides the output index_map.
# ----------------------------------------------------------------------------
def _upsample_nearest_5d(x, s_d: int, s_h: int, s_w: int):
    N, C, D, H, W = x.shape
    D_out, H_out, W_out = D * s_d, H * s_h, W * s_w
    orig_dtype = x.dtype
    is_float = jnp.issubdtype(orig_dtype, jnp.floating)
    rw_dtype = orig_dtype if is_float else jnp.float32

    cout = s_h * W_out
    G = _choose_group(cout, H)              # groups must not cross a depth slab
    rw = _replication_matrix(W, s_h, s_w, G, rw_dtype)
    Hg, K, Cg = H // G, G * W, G * cout
    B = N * C * D

    x_slabs = x.reshape(B, Hg, K)           # metadata-only view

    in_item = jnp.dtype(orig_dtype).itemsize
    rw_bytes = K * Cg * jnp.dtype(rw_dtype).itemsize
    in_block = Hg * K * in_item
    out_block = Hg * Cg * in_item

    cost = pl.CostEstimate(
        flops=int(2 * B * s_d * Hg * K * Cg),
        transcendentals=0,
        bytes_accessed=int(B * (in_block + s_d * out_block) + rw_bytes))

    # TODO(synk): one depth slab per step keeps all in-kernel reshapes to
    #             leading unit dims (guaranteed free); fuse multiple slabs per
    #             step for deeper 3-D stages once multi-slab relayouts are
    #             validated on Mosaic.
    out_flat = pl.pallas_call(
        _upsample_kernel,
        out_shape=jax.ShapeDtypeStruct((B, s_d, Hg, Cg), orig_dtype),
        grid_spec=pltpu.PrefetchScalarGridSpec(
            num_scalar_prefetch=0,
            grid=(B, s_d),                  # r innermost: input block re-used
            in_specs=[
                pl.BlockSpec((1, Hg, K), lambda i, r: (i, 0, 0)),
                pl.BlockSpec((K, Cg), lambda i, r: (0, 0)),
            ],
            out_specs=pl.BlockSpec((1, 1, Hg, Cg), lambda i, r: (i, r, 0, 0)),
        ),
        compiler_params=pltpu.CompilerParams(
            dimension_semantics=("parallel", "parallel"),
            vmem_limit_bytes=_vmem_limit_bytes(in_block, out_block, rw_bytes),
        ),
        cost_estimate=cost,
    )(x_slabs, rw)

    # (B, s_d, Hg, G*s_h*W_out) row-major == (N,C,D,s_d,H,s_h,W_out) flat.
    return out_flat.reshape(N, C, D_out, H_out, W_out)


# ----------------------------------------------------------------------------
# Public wrapper mirroring nn.functional.interpolate(mode='nearest')
# ----------------------------------------------------------------------------
def _integer_scales(shape, scale_factor, size):
    spatial = shape[2:]
    n = len(spatial)
    if size is not None:
        sizes = (size,) * n if isinstance(size, int) else tuple(int(v) for v in size)
        if len(sizes) != n or any(o % i for o, i in zip(sizes, spatial)):
            # TODO(synk): general `size=` nearest (non-integer ratios).
            raise NotImplementedError(
                "size= only supported when every output dim is an integer "
                "multiple of the input dim")
        return tuple(o // i for o, i in zip(sizes, spatial))
    if scale_factor is None:
        raise ValueError("either scale_factor or size must be given")
    sf = scale_factor if isinstance(scale_factor, (tuple, list)) else (scale_factor,) * n
    if len(sf) != n:
        raise ValueError("scale_factor length does not match spatial dims")
    scales = []
    for s in sf:
        si = int(round(float(s)))
        if si < 1 or abs(float(s) - si) > 1e-6:
            # TODO(synk): fractional scale factors not implemented.
            raise NotImplementedError("only integer scale factors are supported")
        scales.append(si)
    return tuple(scales)


def upsample_nearest(x, scale_factor=None, size=None):
    nsp = x.ndim - 2
    scales = _integer_scales(x.shape, scale_factor, size)
    if nsp == 2:
        return _upsample_nearest_4d(x, *scales)
    if nsp == 3:
        return _upsample_nearest_5d(x, *scales)
    # TODO(synk): 1-D (NCL) nearest upsample.
    raise NotImplementedError("only 4-D (NCHW) and 5-D (NCDHW) inputs supported")


class Upsample:
    """Pallas mirror of generic_UNet.Upsample's forward (nearest mode)."""

    def __init__(self, size=None, scale_factor=None, mode='nearest',
                 align_corners=False):
        self.size = size
        self.scale_factor = scale_factor
        self.mode = mode
        self.align_corners = align_corners  # ignored for 'nearest' (as in torch)

    def __call__(self, x):
        if self.mode != 'nearest':
            # TODO(synk): 'bilinear'/'trilinear' modes not implemented.
            raise NotImplementedError("only mode='nearest' is implemented")
        return upsample_nearest(x, scale_factor=self.scale_factor, size=self.size)


if __name__ == "__main__":
    key = jax.random.PRNGKey(0)
    k1, k2, k3 = jax.random.split(key, 3)

    # --- 4-D float path (the configuration generic_UNet uses) ---------------
    N, C, H, W = 2, 4, 16, 16
    scale = 2
    x = jax.random.normal(k1, (N, C, H, W), dtype=jnp.float32)
    up = Upsample(scale_factor=scale, mode='nearest', align_corners=False)
    y = jax.block_until_ready(up(x))

    src_h = _nearest_src_index(H * scale, H)
    src_w = _nearest_src_index(W * scale, W)
    ref = x[:, :, src_h, :][:, :, :, src_w]
    assert y.shape == (N, C, H * scale, W * scale), y.shape
    assert y.dtype == x.dtype, y.dtype
    assert jnp.allclose(y, ref), "4-D float mismatch vs nearest reference"

    # --- 4-D integer path (segmentation label maps, no wrapper casts) -------
    xi = jax.random.randint(k2, (1, 2, 16, 16), 0, 10, dtype=jnp.int32)
    yi = jax.block_until_ready(Upsample(scale_factor=2, mode='nearest')(xi))
    refi = xi[:, :, src_h, :][:, :, :, src_w]
    assert yi.dtype == jnp.int32, yi.dtype
    assert jnp.array_equal(yi, refi), "4-D int mismatch vs nearest reference"

    # --- 5-D path (3-D UNet, NCDHW) ------------------------------------------
    Dd = 4
    x3 = jax.random.normal(k3, (1, 2, Dd, 16, 16), dtype=jnp.float32)
    y3 = jax.block_until_ready(Upsample(scale_factor=(2, 2, 2), mode='nearest')(x3))
    src_d = _nearest_src_index(Dd * 2, Dd)
    ref3 = x3[:, :, src_d][:, :, :, src_h][:, :, :, :, src_w]
    assert y3.shape == (1, 2, Dd * 2, 32, 32), y3.shape
    assert jnp.allclose(y3, ref3), "5-D mismatch vs nearest reference"

    print("KERNEL_OK")
</pallas_src>

<mosaic_0001>
module attributes {stable_mosaic.version = 11 : i64} {
  func.func @_upsample_kernel(%arg0: i32, %arg1: memref<32x32xf32, #tpu.memory_space<vmem>>, %arg2: memref<32x128xf32, #tpu.memory_space<vmem>>, %arg3: memref<32x128xf32, #tpu.memory_space<vmem>>) attributes {dimension_semantics = [#tpu.dimension_semantics<parallel>], iteration_bounds = array<i64: 2>, scalar_prefetch = 0 : i64, scratch_operands = 0 : i64, tpu.core_type = #tpu.core_type<tc>, window_params = [{transform_indices = @transform_0, window_bounds = array<i64: 32, 32>}, {pipeline_mode = #tpu.pipeline_mode<synchronous>, transform_indices = @transform_1, window_bounds = array<i64: 32, 128>}, {transform_indices = @transform_2, window_bounds = array<i64: 32, 128>}]} {
    %c0 = arith.constant 0 : index
    %c0_0 = arith.constant 0 : index
    %0 = vector.load %arg1[%c0, %c0_0] : memref<32x32xf32, #tpu.memory_space<vmem>>, vector<32x32xf32>
    %c0_1 = arith.constant 0 : index
    %c0_2 = arith.constant 0 : index
    %1 = vector.load %arg2[%c0_1, %c0_2] : memref<32x128xf32, #tpu.memory_space<vmem>>, vector<32x128xf32>
    %cst = arith.constant dense<0.000000e+00> : vector<32x128xf32>
    %2 = tpu.matmul %0, %1, %cst {dimension_numbers = #tpu.dot_dimension_numbers<[1], [0], [0], [1], [0, 0, 1, 1], [], []>} : vector<32x32xf32>, vector<32x128xf32>, vector<32x128xf32> -> vector<32x128xf32>
    %c0_3 = arith.constant 0 : index
    %c0_4 = arith.constant 0 : index
    %3 = vector.load %arg3[%c0_3, %c0_4] : memref<32x128xf32, #tpu.memory_space<vmem>>, vector<32x128xf32>
    tpu.vector_store %arg3[%c0_3, %c0_4], %2 {strides = array<i32>} : memref<32x128xf32, #tpu.memory_space<vmem>>, vector<32x128xf32>,
    return
  }
  func.func @transform_0(%arg0: i32) -> (i32, i32) {
    %c0_i32 = arith.constant 0 : i32
    %c0_i32_0 = arith.constant 0 : i32
    return %arg0, %c0_i32 : i32, i32
  }
  func.func @transform_1(%arg0: i32) -> (i32, i32) {
    %c0_i32 = arith.constant 0 : i32
    %c0_i32_0 = arith.constant 0 : i32
    %c0_i32_1 = arith.constant 0 : i32
    return %c0_i32, %c0_i32_0 : i32, i32
  }
  func.func @transform_2(%arg0: i32) -> (i32, i32) {
    %c0_i32 = arith.constant 0 : i32
    %c0_i32_0 = arith.constant 0 : i32
    return %arg0, %c0_i32 : i32, i32
  }
}

</mosaic_0001>

<llo_original>
// kernel: tpu_custom_call.1
$region0: #{tpu_custom_call.1}
  #allocation0 [shape = 'u32[]', space=smem, size = 0x4, offset = 0x4, fixed_abs, tag = 'smem constant byte address 0x4 - core index']
  #allocation1 [shape = 'u32[72,128]{1,0:T(1,128)}', space=vmem, size = 0x9000, scoped, tag = 'internal scratch']
  %s0 = inlined_call_operand.vmem [shape: f32[64,32], index: 0, kind: input, shape index: {}]
  %s1 = inlined_call_operand.vmem [shape: f32[32,128], index: 1, kind: input, shape index: {}]
  %s2 = inlined_call_operand.hbm [shape: f32[64,128], index: 2, kind: output, shape index: {}]
  %s3 = sld [smem:[#allocation0]]
  $region41: #{tpu_custom_call.1} parent=0
    _
  %s5 = ssub.s32 1, %s3
  %s6 = scalar_select 0, %s5, %s3
  $region1: #{tpu_custom_call.1} parent=0
    #allocation2 [shape = 'u8[32768]{0}', space=vmem, size = 0x8000, scoped, tag = 'output window, operand 0']
    #allocation3 [shape = 's32[2]{0}', space=sflag, size = 0x8, scoped, tag = 'scoped memory for tpu_custom_call.1']
    %7 = vsyncpa [#allocation3], 0
    %s8 = scalar_lea.sflag [#allocation3], 1
    %9 = vsyncpa %s8, 0
    loop: start=0, step=1, limit=4
    $region2: #{tpu_custom_call.1} parent=1 // loop_pre_header
      _
    $region3: #{tpu_custom_call.1} parent=1 // loop_header
      %s11 = sphi 0, %s15
      %p12 = scmp.ge.s32.totalorder %s11, 4
      %s21 = sphi 0, %s23
      %s24 = sphi 0, %s21
      %s25 = sphi 0, %s24
      %s41 = sphi 0, %s25
      %s45 = sphi 0, %s45
      %s47 = sphi 0, %s45
      %s48 = sphi 0, %s47
      %s62 = sphi 0, %s48
      %s68 = sphi 0, %s70
      %s71 = sphi 0, %s68
      %s72 = sphi 0, %s71
      %s88 = sphi 0, %s72
    $region4: #{tpu_custom_call.1} parent=1 // loop_header_branch
      %14 = sbr.rel (%p12) target = $region8
    $region5: #{tpu_custom_call.1} parent=1 // loop_body
      %s16 = ssub.s32 %s11, 1
      %s17 = ssub.s32 %s11, 2
      %s18 = sadd.s32 %s11, 1
      %s19 = ssub.s32 %s11, %s18
      %p20 = scmp.eq.s32.totalorder %s19, 0
      %s22 = sadd.s32 %s21, 1
      %s23 = scalar_select %p20, %s21, %s22
      %p26 = pneg %p20
      %p27 = scmp.eq.s32.totalorder %s11, 1
      %p28 = por %p26, %p27
      %p29 = scmp.ne.s32.totalorder %s21, %s24
      %p30 = scmp.eq.s32.totalorder %s11, 0
      %p31 = por %p29, %p30
      %p32 = scmp.ne.s32.totalorder %s21, %s24
      %p33 = scmp.eq.s32.totalorder %s16, 1
      %p34 = por %p32, %p33
      %p35 = scmp.ne.s32.totalorder %s24, %s25
      %p36 = scmp.eq.s32.totalorder %s16, 0
      %p37 = por %p35, %p36
      %p38 = scmp.ne.s32.totalorder %s24, %s25
      %p39 = scmp.eq.s32.totalorder %s17, 1
      %p40 = por %p38, %p39
      %p42 = scmp.ne.s32.totalorder %s25, %s41
      %p43 = scmp.eq.s32.totalorder %s17, 0
      %p44 = por %p42, %p43
      %s46 = sadd.s32 %s45, 1
      %p49 = scmp.eq.s32.totalorder %s11, 1
      %p50 = scmp.ne.s32.totalorder %s45, %s47
      %p51 = scmp.eq.s32.totalorder %s11, 0
      %p52 = por %p50, %p51
      %p53 = scmp.ne.s32.totalorder %s45, %s47
      %p54 = scmp.eq.s32.totalorder %s16, 1
      %p55 = por %p53, %p54
      %p56 = scmp.ne.s32.totalorder %s47, %s48
      %p57 = scmp.eq.s32.totalorder %s16, 0
      %p58 = por %p56, %p57
      %p59 = scmp.ne.s32.totalorder %s47, %s48
      %p60 = scmp.eq.s32.totalorder %s17, 1
      %p61 = por %p59, %p60
      %p63 = scmp.ne.s32.totalorder %s48, %s62
      %p64 = scmp.eq.s32.totalorder %s17, 0
      %p65 = por %p63, %p64
      %s66 = ssub.s32 %s11, %s18
      %p67 = scmp.eq.s32.totalorder %s66, 0
      %s69 = sadd.s32 %s68, 1
      %s70 = scalar_select %p67, %s68, %s69
      %p73 = pneg %p67
      %p74 = scmp.eq.s32.totalorder %s11, 1
      %p75 = por %p73, %p74
      %p76 = scmp.ne.s32.totalorder %s68, %s71
      %p77 = scmp.eq.s32.totalorder %s11, 0
      %p78 = por %p76, %p77
      %p79 = scmp.ne.s32.totalorder %s68, %s71
      %p80 = scmp.eq.s32.totalorder %s16, 1
      %p81 = por %p79, %p80
      %p82 = scmp.ne.s32.totalorder %s71, %s72
      %p83 = scmp.eq.s32.totalorder %s16, 0
      %p84 = por %p82, %p83
      %p85 = scmp.ne.s32.totalorder %s71, %s72
      %p86 = scmp.eq.s32.totalorder %s17, 1
      %p87 = por %p85, %p86
      %p89 = scmp.ne.s32.totalorder %s72, %s88
      %p90 = scmp.eq.s32.totalorder %s17, 0
      %p91 = por %p89, %p90
      %p92 = scmp.le.s32.totalorder 1, %s11
      %p93 = scmp.lt.s32.totalorder %s11, 3
      %p94 = pnand %p92, %p93
      %p95 = pneg %p94
      // Predicated region
      $region9: #{tpu_custom_call.1} parent=5 // pred_check
        _
      $region10: #{tpu_custom_call.1} parent=5 // pred_check_branch
        %97 = sbr.rel (%p94) target = $region12
      $region11: #{tpu_custom_call.1} parent=5 // pred_region
        %s98 = ssub.s32 %s11, 1
        // Predicated region
        $region13: #{tpu_custom_call.1} parent=11 // pred_check
          %p99 = pneg %p58
        $region14: #{tpu_custom_call.1} parent=11 // pred_check_branch
          %101 = sbr.rel (%p99) target = $region16
        $region15: #{tpu_custom_call.1} parent=11 // pred_region
          _
        $region16: #{tpu_custom_call.1} parent=11 // pred_fallthru
          _
      $region12: #{tpu_custom_call.1} parent=5 // pred_fallthru
        _
      %p102 = scmp.lt.s32.totalorder %s11, 2
      // Predicated region
      $region17: #{tpu_custom_call.1} parent=5 // pred_check
        %p103 = pneg %p102
      $region18: #{tpu_custom_call.1} parent=5 // pred_check_branch
        %105 = sbr.rel (%p103) target = $region20
      $region19: #{tpu_custom_call.1} parent=5 // pred_region
        // Predicated region
        $region21: #{tpu_custom_call.1} parent=19 // pred_check
          %p106 = pneg %p31
        $region22: #{tpu_custom_call.1} parent=19 // pred_check_branch
          %108 = sbr.rel (%p106) target = $region24
        $region23: #{tpu_custom_call.1} parent=19 // pred_region
          %s109 = smul.u32 4, %s11
          %p110 = scmp.lt.s32.totalorder %s109, 7
          %s111 = scalar_select %p110, %s109, 7
          %s112 = smul.addr %s111, 8
          %s113 = scalar_lea.vmem %s0, %s112
          %s114 = smul.u32 4, %s11
        $region24: #{tpu_custom_call.1} parent=19 // pred_fallthru
          _
      $region20: #{tpu_custom_call.1} parent=5 // pred_fallthru
        _
      %p115 = scmp.le.s32.totalorder 1, %s11
      %p116 = scmp.lt.s32.totalorder %s11, 3
      %p117 = pnand %p115, %p116
      %p118 = pneg %p117
      // Predicated region
      $region25: #{tpu_custom_call.1} parent=5 // pred_check
        _
      $region26: #{tpu_custom_call.1} parent=5 // pred_check_branch
        %120 = sbr.rel (%p117) target = $region28
      $region27: #{tpu_custom_call.1} parent=5 // pred_region
        %s121 = ssub.s32 %s11, 1
        %s122 = smul.u32 4, %s16
        %p123 = scmp.lt.s32.totalorder %s122, 7
        %s124 = scalar_select %p123, %s122, 7
        %s125 = smul.addr %s124, 8
        %s126 = scalar_lea.vmem %s0, %s125
        %p127 = pneg %p37
        %p128 = pneg %p34
        %p129 = pneg %p58
        %p130 = pneg %p55
        %p131 = pneg %p84
        %p132 = pneg %p81
        %s133 = sand.u32 %s71, 1
        %s134 = scalar_lea.sflag [#allocation3], %s133
        %s135 = sand.u32 %s71, 1
        %s136 = smul.addr %s135, 32
        %s137 = scalar_lea.vmem [#allocation2], %s136
        %s138 = smul.u32 4, %s16
        %p139 = scmp.lt.s32.totalorder %s138, 7
        %s140 = scalar_select %p139, %s138, 7
        %s141 = smul.addr %s140, 8
        %s142 = scalar_lea.vmem %s0, %s141
        %s143 = smul.u32 4, %s16
        %s144 = smul.u32 4, %s16
        %v145 = vld [vmem:[%s142] sm:$0xff]
        %v146 = vld [vmem:[%s142 + $0x8] sm:$0xff]
        %v147 = vld [vmem:[%s142 + $0x10] sm:$0xff]
        %v148 = vld [vmem:[%s142 + $0x18] sm:$0xff]
        %v149 = vld [vmem:[%s1] sm:$0xff]
        %v150 = vld [vmem:[%s1 + $0x8] sm:$0xff]
        %v151 = vld [vmem:[%s1 + $0x10] sm:$0xff]
        %v152 = vld [vmem:[%s1 + $0x18] sm:$0xff]
        %vm153 = vcmask 261120
        %v155 = vsel %vm153, %v145, 0
        %v158 = vsel %vm153, %v146, 0
        %v161 = vsel %vm153, %v147, 0
        %v164 = vsel %vm153, %v148, 0
        %166 = vmatpush.msra.mxu0 0.0
        %167 = vmatpush.msra.mxu0 0.0
        %168 = vmatpush.msra.mxu0 0.0
        %169 = vmatpush.msra.mxu0 0.0
        %170 = vmatpush.msra.mxu0 0.0
        %171 = vmatpush.msra.mxu0 0.0
        %172 = vmatpush.msra.mxu0 0.0
        %173 = vmatpush.msra.mxu0 0.0
        %174 = vmatpush.msra.mxu0 0.0
        %175 = vmatpush.msra.mxu0 0.0
        %176 = vmatpush.msra.mxu0 0.0
        %177 = vmatpush.msra.mxu0 0.0
        %178 = vmatpush.msra.mxu0 %v152
        %179 = vmatpush.msra.mxu0 %v151
        %180 = vmatpush.msra.mxu0 %v150
        %181 = vmatpush.msra.mxu0 %v149
        %182 = vmatmul.f32.gmra.mxu0 %v155
        %v183 = vpop.f32.mrf.mxu0
        %v184 = vadd.f32 0.0, %v183
        %185 = vmatmul.f32.gmra.mxu0 %v158
        %v186 = vpop.f32.mrf.mxu0
        %v187 = vadd.f32 0.0, %v186
        %188 = vmatmul.f32.gmra.mxu0 %v161
        %v189 = vpop.f32.mrf.mxu0
        %v190 = vadd.f32 0.0, %v189
        %191 = vmatmul.f32.gmra.mxu0 %v164
        %v192 = vpop.f32.mrf.mxu0
        %v193 = vadd.f32 0.0, %v192
        %194 = vdwg.mxu0
        %195 = vst [vmem:[%s137] sm:$0xff] %v184
        %196 = vst [vmem:[%s137 + $0x8] sm:$0xff] %v187
        %197 = vst [vmem:[%s137 + $0x10] sm:$0xff] %v190
        %198 = vst [vmem:[%s137 + $0x18] sm:$0xff] %v193
        %s199 = sand.u32 %s71, 1
        %s200 = scalar_lea.sflag [#allocation3], %s199
        %s201 = sand.u32 %s71, 1
        %s202 = smul.addr %s201, 32
        %s203 = scalar_lea.vmem [#allocation2], %s202
        // Predicated region
        $region29: #{tpu_custom_call.1} parent=27 // pred_check
          %p204 = pneg %p81
        $region30: #{tpu_custom_call.1} parent=27 // pred_check_branch
          %206 = sbr.rel (%p204) target = $region32
        $region31: #{tpu_custom_call.1} parent=27 // pred_region
          %s207 = smul.u32 4, %s16
          %209 = vsyncadd %s200, 0
          %s210 = smul.addr %s207, 8
          %s211 = scalar_lea.hbm %s2, %s210
          %s212 = sshll.u32 %s203, 4
          %s213 = int_to_ptr.vmem [resolvable:$true] %s212
          %s214 = sshll.u32 %s211, 4
          %s215 = int_to_ptr.hbm [resolvable:$true] %s214
          %220 = dma.vmem_to_hbm [thread:$0]  %s213, 512, %s215, %s200, 128, 128, 8
        $region32: #{tpu_custom_call.1} parent=27 // pred_fallthru
          _
      $region28: #{tpu_custom_call.1} parent=5 // pred_fallthru
        _
      %p221 = scmp.le.s32.totalorder 2, %s11
      // Predicated region
      $region33: #{tpu_custom_call.1} parent=5 // pred_check
        %p222 = pneg %p221
      $region34: #{tpu_custom_call.1} parent=5 // pred_check_branch
        %224 = sbr.rel (%p222) target = $region36
      $region35: #{tpu_custom_call.1} parent=5 // pred_region
        %s225 = ssub.s32 %s11, 2
        // Predicated region
        $region37: #{tpu_custom_call.1} parent=35 // pred_check
          %p226 = pneg %p87
        $region38: #{tpu_custom_call.1} parent=35 // pred_check_branch
          %228 = sbr.rel (%p226) target = $region40
        $region39: #{tpu_custom_call.1} parent=35 // pred_region
          %s229 = sand.u32 %s72, 1
          %s230 = scalar_lea.sflag [#allocation3], %s229
          %s231 = sand.u32 %s72, 1
          %s232 = smul.addr %s231, 32
          %s233 = scalar_lea.vmem [#allocation2], %s232
          %235 = dma.done %s230, 512
        $region40: #{tpu_custom_call.1} parent=35 // pred_fallthru
          _
      $region36: #{tpu_custom_call.1} parent=5 // pred_fallthru
        _
    $region6: #{tpu_custom_call.1} parent=1 // loop_footer
      %s15 = sadd.s32 1, %s11
    $region7: #{tpu_custom_call.1} parent=1 // loop_footer_branch
      %10 = sbr.rel target = $region3
    $region8: #{tpu_custom_call.1} parent=1 // loop_exit
      _
    %236 = vsyncpa [#allocation3], 1
    %s237 = scalar_lea.sflag [#allocation3], 1
    %238 = vsyncpa %s237, 1

</llo_original>
